<compile_context>
chip_gen: v5e
topology: v5e:2x2
jax: 0.10.0
libtpu: 0.0.40
codegen_flags: <defaults>
</compile_context>

<pallas_src>
import jax
import jax.numpy as jnp
from jax.experimental import pallas as pl
from jax.experimental.pallas import tpu as pltpu

INPUT_SIZE = 5
HIDDEN_SIZE = 10
OUTPUT_SIZE = 1

LANE = 128
MAX_TILE_R = 1024        # 1024 sublane rows * 128 lanes = 131072 samples / step
MIN_SPLIT_R = 64         # only split across 2 grid steps if each half >= 8K samples
VMEM_LIMIT_BYTES = 32 * 1024 * 1024


def _round_up(n, m):
    return ((n + m - 1) // m) * m


def _ceil_div(a, b):
    return -(-a // b)


def _choose_tile_r(r_total):
    """Pick sublane rows per grid step (static Python int)."""
    if r_total < 2 * MIN_SPLIT_R:
        return r_total                       # tiny batch: one full-extent block
    # Split so v7x's second TensorCore gets work; cap for VMEM footprint.
    half = _round_up((r_total + 1) // 2, 8)  # tile must be a multiple of 8 rows
    return min(half, MAX_TILE_R)


def _mlp_kernel(w1_ref, b1_ref, w2_ref, b2_ref, x_ref, o_ref):
    """x_ref: [INPUT_SIZE, TILE_R, 128] f32 (batch on sublanes+lanes).

    w1_ref: [HIDDEN*INPUT] f32 SMEM, b1_ref: [HIDDEN] f32 SMEM,
    w2_ref: [HIDDEN] (OUTPUT*HIDDEN) f32 SMEM, b2_ref: [OUTPUT] f32 SMEM.
    o_ref:  [TILE_R, 128] f32 (the single output unit, batch on sublanes+lanes).
    """
    # Hoist the feature-plane loads out of the hidden-unit loop:
    # exactly INPUT_SIZE loads per 8x128 chunk, keeping the VALU the binding slot.
    xs = [x_ref[i] for i in range(INPUT_SIZE)]

    acc = None
    for h in range(HIDDEN_SIZE):
        # fc1 row h: sum_i x_i * w1[h, i] as broadcast-FMAs; bias added as a
        # scalar operand (no per-h jnp.full broadcast vreg).
        s = xs[0] * w1_ref[h * INPUT_SIZE + 0]
        for i in range(1, INPUT_SIZE):
            s = s + xs[i] * w1_ref[h * INPUT_SIZE + i]
        hidden = jnp.maximum(s + b1_ref[h], 0.0)          # ReLU fused
        contrib = hidden * w2_ref[h]                       # fc2 contribution
        acc = contrib if acc is None else acc + contrib
    o_ref[...] = (acc + b2_ref[0]).astype(o_ref.dtype)


def _net_pallas(xt, w1, b1, w2, b2):
    """xt: [INPUT_SIZE, r_total, 128] f32 -> [r_total, 128] f32."""
    _, r_total, _ = xt.shape
    tile_r = _choose_tile_r(r_total)
    grid_n = _ceil_div(r_total, tile_r)

    smem_spec = pl.BlockSpec(memory_space=pltpu.MemorySpace.SMEM)
    n_samples = r_total * LANE
    weight_bytes = (INPUT_SIZE * HIDDEN_SIZE + HIDDEN_SIZE
                    + HIDDEN_SIZE * OUTPUT_SIZE + OUTPUT_SIZE) * 4

    return pl.pallas_call(
        _mlp_kernel,
        out_shape=jax.ShapeDtypeStruct((r_total, LANE), xt.dtype),
        grid=(grid_n,),
        in_specs=[
            smem_spec,  # w1 (flattened)
            smem_spec,  # b1
            smem_spec,  # w2 (flattened)
            smem_spec,  # b2
            pl.BlockSpec((INPUT_SIZE, tile_r, LANE), lambda i: (0, i, 0)),
        ],
        out_specs=pl.BlockSpec((tile_r, LANE), lambda i: (i, 0)),
        compiler_params=pltpu.CompilerParams(
            dimension_semantics=("parallel",),
            vmem_limit_bytes=VMEM_LIMIT_BYTES,
        ),
        cost_estimate=pl.CostEstimate(
            flops=2 * n_samples * (INPUT_SIZE * HIDDEN_SIZE
                                   + HIDDEN_SIZE * OUTPUT_SIZE),
            transcendentals=0,
            bytes_accessed=n_samples * (INPUT_SIZE + OUTPUT_SIZE) * 4
                           + weight_bytes,
        ),
    )(w1.reshape(-1), b1.reshape(-1), w2.reshape(-1), b2.reshape(-1), xt)


@jax.jit
def net_forward_feature_major(xt, w1, b1, w2, b2):
    """Zero-copy entry point: xt is [INPUT_SIZE, B] f32 with B % 128 == 0.

    Upstream producers that can emit feature-major activations should use this
    path -- it avoids the [B,5] -> [5,B] transpose copy entirely.
    Returns [B, OUTPUT_SIZE].
    """
    padded_b = xt.shape[1]
    r_total = padded_b // LANE
    out = _net_pallas(xt.reshape(INPUT_SIZE, r_total, LANE), w1, b1, w2, b2)
    return out.reshape(padded_b, OUTPUT_SIZE)


@jax.jit
def net_forward(x, w1, b1, w2, b2):
    """Module-faithful path: x [B, INPUT_SIZE] f32 -> [B, OUTPUT_SIZE] f32.

    Weights use the PyTorch nn.Linear layout: w1 [HIDDEN, INPUT], b1 [HIDDEN],
    w2 [OUTPUT, HIDDEN], b2 [OUTPUT].
    """
    batch = x.shape[0]
    padded_b = _round_up(batch, LANE)          # pad only to a lane multiple
    r_total = padded_b // LANE

    xp = x if padded_b == batch else jnp.pad(x, ((0, padded_b - batch), (0, 0)))
    # Single fused pad+transpose to feature-major (batch-in-lanes) layout.
    # Prefer net_forward_feature_major upstream to skip this copy entirely.
    xt = xp.T.reshape(INPUT_SIZE, r_total, LANE)

    out = _net_pallas(xt, w1, b1, w2, b2)
    return out.reshape(padded_b, OUTPUT_SIZE)[:batch]


def init_params(key):
    """Mirror nn.Linear's U(-1/sqrt(fan_in), 1/sqrt(fan_in)) init, PyTorch layout."""
    k1, k2, k3, k4 = jax.random.split(key, 4)
    bound1 = 1.0 / jnp.sqrt(jnp.float32(INPUT_SIZE))
    bound2 = 1.0 / jnp.sqrt(jnp.float32(HIDDEN_SIZE))
    w1 = jax.random.uniform(k1, (HIDDEN_SIZE, INPUT_SIZE), jnp.float32, -bound1, bound1)
    b1 = jax.random.uniform(k2, (HIDDEN_SIZE,), jnp.float32, -bound1, bound1)
    w2 = jax.random.uniform(k3, (OUTPUT_SIZE, HIDDEN_SIZE), jnp.float32, -bound2, bound2)
    b2 = jax.random.uniform(k4, (OUTPUT_SIZE,), jnp.float32, -bound2, bound2)
    return w1, b1, w2, b2


def _reference(x, w1, b1, w2, b2):
    return jnp.maximum(x @ w1.T + b1, 0.0) @ w2.T + b2


if __name__ == "__main__":
    key = jax.random.PRNGKey(0)
    pkey, xkey, xkey2 = jax.random.split(key, 3)
    w1, b1, w2, b2 = init_params(pkey)

    # Small, module-consistent shapes: batch=8, input_size=5.
    batch = 8
    x = jax.random.normal(xkey, (batch, INPUT_SIZE), jnp.float32)
    out = net_forward(x, w1, b1, w2, b2)
    jax.block_until_ready(out)
    ref = _reference(x, w1, b1, w2, b2)
    assert out.shape == (batch, OUTPUT_SIZE)
    assert jnp.allclose(out, ref, atol=1e-5, rtol=1e-5)

    # Non-multiple-of-128 batch exercises the decoupled lane padding.
    x2 = jax.random.normal(xkey2, (300, INPUT_SIZE), jnp.float32)
    out2 = net_forward(x2, w1, b1, w2, b2)
    jax.block_until_ready(out2)
    assert jnp.allclose(out2, _reference(x2, w1, b1, w2, b2), atol=1e-5, rtol=1e-5)

    # Zero-copy feature-major entry point (what upstream producers should feed).
    padded = _round_up(batch, LANE)
    xt = jnp.pad(x, ((0, padded - batch), (0, 0))).T   # [INPUT_SIZE, 128]
    out3 = net_forward_feature_major(xt, w1, b1, w2, b2)
    jax.block_until_ready(out3)
    assert jnp.allclose(out3[:batch], ref, atol=1e-5, rtol=1e-5)

    print("KERNEL_OK")
</pallas_src>

<mosaic_0001>
module attributes {stable_mosaic.version = 11 : i64} {
  func.func @_mlp_kernel(%arg0: i32, %arg1: memref<50xf32, #tpu.memory_space<smem>>, %arg2: memref<10xf32, #tpu.memory_space<smem>>, %arg3: memref<10xf32, #tpu.memory_space<smem>>, %arg4: memref<1xf32, #tpu.memory_space<smem>>, %arg5: memref<5x1x128xf32, #tpu.memory_space<vmem>>, %arg6: memref<1x128xf32, #tpu.memory_space<vmem>>) attributes {dimension_semantics = [#tpu.dimension_semantics<parallel>], iteration_bounds = array<i64: 1>, scalar_prefetch = 0 : i64, scratch_operands = 0 : i64, tpu.core_type = #tpu.core_type<tc>, window_params = [{transform_indices = @transform_0, window_bounds = array<i64: 50>}, {transform_indices = @transform_1, window_bounds = array<i64: 10>}, {transform_indices = @transform_2, window_bounds = array<i64: 10>}, {transform_indices = @transform_3, window_bounds = array<i64: 1>}, {transform_indices = @transform_4, window_bounds = array<i64: 5, 1, 128>}, {transform_indices = @transform_5, window_bounds = array<i64: 1, 128>}]} {
    %c0 = arith.constant 0 : index
    %c0_0 = arith.constant 0 : index
    %c0_1 = arith.constant 0 : index
    %0 = vector.load %arg5[%c0, %c0_0, %c0_1] : memref<5x1x128xf32, #tpu.memory_space<vmem>>, vector<1x1x128xf32>
    %1 = vector.shape_cast %0 : vector<1x1x128xf32> to vector<1x128xf32>
    %c1 = arith.constant 1 : index
    %c0_2 = arith.constant 0 : index
    %c0_3 = arith.constant 0 : index
    %2 = vector.load %arg5[%c1, %c0_2, %c0_3] : memref<5x1x128xf32, #tpu.memory_space<vmem>>, vector<1x1x128xf32>
    %3 = vector.shape_cast %2 : vector<1x1x128xf32> to vector<1x128xf32>
    %c2 = arith.constant 2 : index
    %c0_4 = arith.constant 0 : index
    %c0_5 = arith.constant 0 : index
    %4 = vector.load %arg5[%c2, %c0_4, %c0_5] : memref<5x1x128xf32, #tpu.memory_space<vmem>>, vector<1x1x128xf32>
    %5 = vector.shape_cast %4 : vector<1x1x128xf32> to vector<1x128xf32>
    %c3 = arith.constant 3 : index
    %c0_6 = arith.constant 0 : index
    %c0_7 = arith.constant 0 : index
    %6 = vector.load %arg5[%c3, %c0_6, %c0_7] : memref<5x1x128xf32, #tpu.memory_space<vmem>>, vector<1x1x128xf32>
    %7 = vector.shape_cast %6 : vector<1x1x128xf32> to vector<1x128xf32>
    %c4 = arith.constant 4 : index
    %c0_8 = arith.constant 0 : index
    %c0_9 = arith.constant 0 : index
    %8 = vector.load %arg5[%c4, %c0_8, %c0_9] : memref<5x1x128xf32, #tpu.memory_space<vmem>>, vector<1x1x128xf32>
    %9 = vector.shape_cast %8 : vector<1x1x128xf32> to vector<1x128xf32>
    %c0_10 = arith.constant 0 : index
    %10 = memref.load %arg1[%c0_10] : memref<50xf32, #tpu.memory_space<smem>>
    %11 = vector.broadcast %10 : f32 to vector<1x128xf32>
    %12 = arith.mulf %1, %11 : vector<1x128xf32>
    %c1_11 = arith.constant 1 : index
    %13 = memref.load %arg1[%c1_11] : memref<50xf32, #tpu.memory_space<smem>>
    %14 = vector.broadcast %13 : f32 to vector<1x128xf32>
    %15 = arith.mulf %3, %14 : vector<1x128xf32>
    %16 = arith.addf %12, %15 : vector<1x128xf32>
    %c2_12 = arith.constant 2 : index
    %17 = memref.load %arg1[%c2_12] : memref<50xf32, #tpu.memory_space<smem>>
    %18 = vector.broadcast %17 : f32 to vector<1x128xf32>
    %19 = arith.mulf %5, %18 : vector<1x128xf32>
    %20 = arith.addf %16, %19 : vector<1x128xf32>
    %c3_13 = arith.constant 3 : index
    %21 = memref.load %arg1[%c3_13] : memref<50xf32, #tpu.memory_space<smem>>
    %22 = vector.broadcast %21 : f32 to vector<1x128xf32>
    %23 = arith.mulf %7, %22 : vector<1x128xf32>
    %24 = arith.addf %20, %23 : vector<1x128xf32>
    %c4_14 = arith.constant 4 : index
    %25 = memref.load %arg1[%c4_14] : memref<50xf32, #tpu.memory_space<smem>>
    %26 = vector.broadcast %25 : f32 to vector<1x128xf32>
    %27 = arith.mulf %9, %26 : vector<1x128xf32>
    %28 = arith.addf %24, %27 : vector<1x128xf32>
    %c0_15 = arith.constant 0 : index
    %29 = memref.load %arg2[%c0_15] : memref<10xf32, #tpu.memory_space<smem>>
    %30 = vector.broadcast %29 : f32 to vector<1x128xf32>
    %31 = arith.addf %28, %30 : vector<1x128xf32>
    %cst = arith.constant 0.000000e+00 : f32
    %32 = vector.broadcast %cst : f32 to vector<1x128xf32>
    %33 = arith.maximumf %31, %32 : vector<1x128xf32>
    %c0_16 = arith.constant 0 : index
    %34 = memref.load %arg3[%c0_16] : memref<10xf32, #tpu.memory_space<smem>>
    %35 = vector.broadcast %34 : f32 to vector<1x128xf32>
    %36 = arith.mulf %33, %35 : vector<1x128xf32>
    %c5 = arith.constant 5 : index
    %37 = memref.load %arg1[%c5] : memref<50xf32, #tpu.memory_space<smem>>
    %38 = vector.broadcast %37 : f32 to vector<1x128xf32>
    %39 = arith.mulf %1, %38 : vector<1x128xf32>
    %c6 = arith.constant 6 : index
    %40 = memref.load %arg1[%c6] : memref<50xf32, #tpu.memory_space<smem>>
    %41 = vector.broadcast %40 : f32 to vector<1x128xf32>
    %42 = arith.mulf %3, %41 : vector<1x128xf32>
    %43 = arith.addf %39, %42 : vector<1x128xf32>
    %c7 = arith.constant 7 : index
    %44 = memref.load %arg1[%c7] : memref<50xf32, #tpu.memory_space<smem>>
    %45 = vector.broadcast %44 : f32 to vector<1x128xf32>
    %46 = arith.mulf %5, %45 : vector<1x128xf32>
    %47 = arith.addf %43, %46 : vector<1x128xf32>
    %c8 = arith.constant 8 : index
    %48 = memref.load %arg1[%c8] : memref<50xf32, #tpu.memory_space<smem>>
    %49 = vector.broadcast %48 : f32 to vector<1x128xf32>
    %50 = arith.mulf %7, %49 : vector<1x128xf32>
    %51 = arith.addf %47, %50 : vector<1x128xf32>
    %c9 = arith.constant 9 : index
    %52 = memref.load %arg1[%c9] : memref<50xf32, #tpu.memory_space<smem>>
    %53 = vector.broadcast %52 : f32 to vector<1x128xf32>
    %54 = arith.mulf %9, %53 : vector<1x128xf32>
    %55 = arith.addf %51, %54 : vector<1x128xf32>
    %c1_17 = arith.constant 1 : index
    %56 = memref.load %arg2[%c1_17] : memref<10xf32, #tpu.memory_space<smem>>
    %57 = vector.broadcast %56 : f32 to vector<1x128xf32>
    %58 = arith.addf %55, %57 : vector<1x128xf32>
    %cst_18 = arith.constant 0.000000e+00 : f32
    %59 = vector.broadcast %cst_18 : f32 to vector<1x128xf32>
    %60 = arith.maximumf %58, %59 : vector<1x128xf32>
    %c1_19 = arith.constant 1 : index
    %61 = memref.load %arg3[%c1_19] : memref<10xf32, #tpu.memory_space<smem>>
    %62 = vector.broadcast %61 : f32 to vector<1x128xf32>
    %63 = arith.mulf %60, %62 : vector<1x128xf32>
    %64 = arith.addf %36, %63 : vector<1x128xf32>
    %c10 = arith.constant 10 : index
    %65 = memref.load %arg1[%c10] : memref<50xf32, #tpu.memory_space<smem>>
    %66 = vector.broadcast %65 : f32 to vector<1x128xf32>
    %67 = arith.mulf %1, %66 : vector<1x128xf32>
    %c11 = arith.constant 11 : index
    %68 = memref.load %arg1[%c11] : memref<50xf32, #tpu.memory_space<smem>>
    %69 = vector.broadcast %68 : f32 to vector<1x128xf32>
    %70 = arith.mulf %3, %69 : vector<1x128xf32>
    %71 = arith.addf %67, %70 : vector<1x128xf32>
    %c12 = arith.constant 12 : index
    %72 = memref.load %arg1[%c12] : memref<50xf32, #tpu.memory_space<smem>>
    %73 = vector.broadcast %72 : f32 to vector<1x128xf32>
    %74 = arith.mulf %5, %73 : vector<1x128xf32>
    %75 = arith.addf %71, %74 : vector<1x128xf32>
    %c13 = arith.constant 13 : index
    %76 = memref.load %arg1[%c13] : memref<50xf32, #tpu.memory_space<smem>>
    %77 = vector.broadcast %76 : f32 to vector<1x128xf32>
    %78 = arith.mulf %7, %77 : vector<1x128xf32>
    %79 = arith.addf %75, %78 : vector<1x128xf32>
    %c14 = arith.constant 14 : index
    %80 = memref.load %arg1[%c14] : memref<50xf32, #tpu.memory_space<smem>>
    %81 = vector.broadcast %80 : f32 to vector<1x128xf32>
    %82 = arith.mulf %9, %81 : vector<1x128xf32>
    %83 = arith.addf %79, %82 : vector<1x128xf32>
    %c2_20 = arith.constant 2 : index
    %84 = memref.load %arg2[%c2_20] : memref<10xf32, #tpu.memory_space<smem>>
    %85 = vector.broadcast %84 : f32 to vector<1x128xf32>
    %86 = arith.addf %83, %85 : vector<1x128xf32>
    %cst_21 = arith.constant 0.000000e+00 : f32
    %87 = vector.broadcast %cst_21 : f32 to vector<1x128xf32>
    %88 = arith.maximumf %86, %87 : vector<1x128xf32>
    %c2_22 = arith.constant 2 : index
    %89 = memref.load %arg3[%c2_22] : memref<10xf32, #tpu.memory_space<smem>>
    %90 = vector.broadcast %89 : f32 to vector<1x128xf32>
    %91 = arith.mulf %88, %90 : vector<1x128xf32>
    %92 = arith.addf %64, %91 : vector<1x128xf32>
    %c15 = arith.constant 15 : index
    %93 = memref.load %arg1[%c15] : memref<50xf32, #tpu.memory_space<smem>>
    %94 = vector.broadcast %93 : f32 to vector<1x128xf32>
    %95 = arith.mulf %1, %94 : vector<1x128xf32>
    %c16 = arith.constant 16 : index
    %96 = memref.load %arg1[%c16] : memref<50xf32, #tpu.memory_space<smem>>
    %97 = vector.broadcast %96 : f32 to vector<1x128xf32>
    %98 = arith.mulf %3, %97 : vector<1x128xf32>
    %99 = arith.addf %95, %98 : vector<1x128xf32>
    %c17 = arith.constant 17 : index
    %100 = memref.load %arg1[%c17] : memref<50xf32, #tpu.memory_space<smem>>
    %101 = vector.broadcast %100 : f32 to vector<1x128xf32>
    %102 = arith.mulf %5, %101 : vector<1x128xf32>
    %103 = arith.addf %99, %102 : vector<1x128xf32>
    %c18 = arith.constant 18 : index
    %104 = memref.load %arg1[%c18] : memref<50xf32, #tpu.memory_space<smem>>
    %105 = vector.broadcast %104 : f32 to vector<1x128xf32>
    %106 = arith.mulf %7, %105 : vector<1x128xf32>
    %107 = arith.addf %103, %106 : vector<1x128xf32>
    %c19 = arith.constant 19 : index
    %108 = memref.load %arg1[%c19] : memref<50xf32, #tpu.memory_space<smem>>
    %109 = vector.broadcast %108 : f32 to vector<1x128xf32>
    %110 = arith.mulf %9, %109 : vector<1x128xf32>
    %111 = arith.addf %107, %110 : vector<1x128xf32>
    %c3_23 = arith.constant 3 : index
    %112 = memref.load %arg2[%c3_23] : memref<10xf32, #tpu.memory_space<smem>>
    %113 = vector.broadcast %112 : f32 to vector<1x128xf32>
    %114 = arith.addf %111, %113 : vector<1x128xf32>
    %cst_24 = arith.constant 0.000000e+00 : f32
    %115 = vector.broadcast %cst_24 : f32 to vector<1x128xf32>
    %116 = arith.maximumf %114, %115 : vector<1x128xf32>
    %c3_25 = arith.constant 3 : index
    %117 = memref.load %arg3[%c3_25] : memref<10xf32, #tpu.memory_space<smem>>
    %118 = vector.broadcast %117 : f32 to vector<1x128xf32>
    %119 = arith.mulf %116, %118 : vector<1x128xf32>
    %120 = arith.addf %92, %119 : vector<1x128xf32>
    %c20 = arith.constant 20 : index
    %121 = memref.load %arg1[%c20] : memref<50xf32, #tpu.memory_space<smem>>
    %122 = vector.broadcast %121 : f32 to vector<1x128xf32>
    %123 = arith.mulf %1, %122 : vector<1x128xf32>
    %c21 = arith.constant 21 : index
    %124 = memref.load %arg1[%c21] : memref<50xf32, #tpu.memory_space<smem>>
    %125 = vector.broadcast %124 : f32 to vector<1x128xf32>
    %126 = arith.mulf %3, %125 : vector<1x128xf32>
    %127 = arith.addf %123, %126 : vector<1x128xf32>
    %c22 = arith.constant 22 : index
    %128 = memref.load %arg1[%c22] : memref<50xf32, #tpu.memory_space<smem>>
    %129 = vector.broadcast %128 : f32 to vector<1x128xf32>
    %130 = arith.mulf %5, %129 : vector<1x128xf32>
    %131 = arith.addf %127, %130 : vector<1x128xf32>
    %c23 = arith.constant 23 : index
    %132 = memref.load %arg1[%c23] : memref<50xf32, #tpu.memory_space<smem>>
    %133 = vector.broadcast %132 : f32 to vector<1x128xf32>
    %134 = arith.mulf %7, %133 : vector<1x128xf32>
    %135 = arith.addf %131, %134 : vector<1x128xf32>
    %c24 = arith.constant 24 : index
    %136 = memref.load %arg1[%c24] : memref<50xf32, #tpu.memory_space<smem>>
    %137 = vector.broadcast %136 : f32 to vector<1x128xf32>
    %138 = arith.mulf %9, %137 : vector<1x128xf32>
    %139 = arith.addf %135, %138 : vector<1x128xf32>
    %c4_26 = arith.constant 4 : index
    %140 = memref.load %arg2[%c4_26] : memref<10xf32, #tpu.memory_space<smem>>
    %141 = vector.broadcast %140 : f32 to vector<1x128xf32>
    %142 = arith.addf %139, %141 : vector<1x128xf32>
    %cst_27 = arith.constant 0.000000e+00 : f32
    %143 = vector.broadcast %cst_27 : f32 to vector<1x128xf32>
    %144 = arith.maximumf %142, %143 : vector<1x128xf32>
    %c4_28 = arith.constant 4 : index
    %145 = memref.load %arg3[%c4_28] : memref<10xf32, #tpu.memory_space<smem>>
    %146 = vector.broadcast %145 : f32 to vector<1x128xf32>
    %147 = arith.mulf %144, %146 : vector<1x128xf32>
    %148 = arith.addf %120, %147 : vector<1x128xf32>
    %c25 = arith.constant 25 : index
    %149 = memref.load %arg1[%c25] : memref<50xf32, #tpu.memory_space<smem>>
    %150 = vector.broadcast %149 : f32 to vector<1x128xf32>
    %151 = arith.mulf %1, %150 : vector<1x128xf32>
    %c26 = arith.constant 26 : index
    %152 = memref.load %arg1[%c26] : memref<50xf32, #tpu.memory_space<smem>>
    %153 = vector.broadcast %152 : f32 to vector<1x128xf32>
    %154 = arith.mulf %3, %153 : vector<1x128xf32>
    %155 = arith.addf %151, %154 : vector<1x128xf32>
    %c27 = arith.constant 27 : index
    %156 = memref.load %arg1[%c27] : memref<50xf32, #tpu.memory_space<smem>>
    %157 = vector.broadcast %156 : f32 to vector<1x128xf32>
    %158 = arith.mulf %5, %157 : vector<1x128xf32>
    %159 = arith.addf %155, %158 : vector<1x128xf32>
    %c28 = arith.constant 28 : index
    %160 = memref.load %arg1[%c28] : memref<50xf32, #tpu.memory_space<smem>>
    %161 = vector.broadcast %160 : f32 to vector<1x128xf32>
    %162 = arith.mulf %7, %161 : vector<1x128xf32>
    %163 = arith.addf %159, %162 : vector<1x128xf32>
    %c29 = arith.constant 29 : index
    %164 = memref.load %arg1[%c29] : memref<50xf32, #tpu.memory_space<smem>>
    %165 = vector.broadcast %164 : f32 to vector<1x128xf32>
    %166 = arith.mulf %9, %165 : vector<1x128xf32>
    %167 = arith.addf %163, %166 : vector<1x128xf32>
    %c5_29 = arith.constant 5 : index
    %168 = memref.load %arg2[%c5_29] : memref<10xf32, #tpu.memory_space<smem>>
    %169 = vector.broadcast %168 : f32 to vector<1x128xf32>
    %170 = arith.addf %167, %169 : vector<1x128xf32>
    %cst_30 = arith.constant 0.000000e+00 : f32
    %171 = vector.broadcast %cst_30 : f32 to vector<1x128xf32>
    %172 = arith.maximumf %170, %171 : vector<1x128xf32>
    %c5_31 = arith.constant 5 : index
    %173 = memref.load %arg3[%c5_31] : memref<10xf32, #tpu.memory_space<smem>>
    %174 = vector.broadcast %173 : f32 to vector<1x128xf32>
    %175 = arith.mulf %172, %174 : vector<1x128xf32>
    %176 = arith.addf %148, %175 : vector<1x128xf32>
    %c30 = arith.constant 30 : index
    %177 = memref.load %arg1[%c30] : memref<50xf32, #tpu.memory_space<smem>>
    %178 = vector.broadcast %177 : f32 to vector<1x128xf32>
    %179 = arith.mulf %1, %178 : vector<1x128xf32>
    %c31 = arith.constant 31 : index
    %180 = memref.load %arg1[%c31] : memref<50xf32, #tpu.memory_space<smem>>
    %181 = vector.broadcast %180 : f32 to vector<1x128xf32>
    %182 = arith.mulf %3, %181 : vector<1x128xf32>
    %183 = arith.addf %179, %182 : vector<1x128xf32>
    %c32 = arith.constant 32 : index
    %184 = memref.load %arg1[%c32] : memref<50xf32, #tpu.memory_space<smem>>
    %185 = vector.broadcast %184 : f32 to vector<1x128xf32>
    %186 = arith.mulf %5, %185 : vector<1x128xf32>
    %187 = arith.addf %183, %186 : vector<1x128xf32>
    %c33 = arith.constant 33 : index
    %188 = memref.load %arg1[%c33] : memref<50xf32, #tpu.memory_space<smem>>
    %189 = vector.broadcast %188 : f32 to vector<1x128xf32>
    %190 = arith.mulf %7, %189 : vector<1x128xf32>
    %191 = arith.addf %187, %190 : vector<1x128xf32>
    %c34 = arith.constant 34 : index
    %192 = memref.load %arg1[%c34] : memref<50xf32, #tpu.memory_space<smem>>
    %193 = vector.broadcast %192 : f32 to vector<1x128xf32>
    %194 = arith.mulf %9, %193 : vector<1x128xf32>
    %195 = arith.addf %191, %194 : vector<1x128xf32>
    %c6_32 = arith.constant 6 : index
    %196 = memref.load %arg2[%c6_32] : memref<10xf32, #tpu.memory_space<smem>>
    %197 = vector.broadcast %196 : f32 to vector<1x128xf32>
    %198 = arith.addf %195, %197 : vector<1x128xf32>
    %cst_33 = arith.constant 0.000000e+00 : f32
    %199 = vector.broadcast %cst_33 : f32 to vector<1x128xf32>
    %200 = arith.maximumf %198, %199 : vector<1x128xf32>
    %c6_34 = arith.constant 6 : index
    %201 = memref.load %arg3[%c6_34] : memref<10xf32, #tpu.memory_space<smem>>
    %202 = vector.broadcast %201 : f32 to vector<1x128xf32>
    %203 = arith.mulf %200, %202 : vector<1x128xf32>
    %204 = arith.addf %176, %203 : vector<1x128xf32>
    %c35 = arith.constant 35 : index
    %205 = memref.load %arg1[%c35] : memref<50xf32, #tpu.memory_space<smem>>
    %206 = vector.broadcast %205 : f32 to vector<1x128xf32>
    %207 = arith.mulf %1, %206 : vector<1x128xf32>
    %c36 = arith.constant 36 : index
    %208 = memref.load %arg1[%c36] : memref<50xf32, #tpu.memory_space<smem>>
    %209 = vector.broadcast %208 : f32 to vector<1x128xf32>
    %210 = arith.mulf %3, %209 : vector<1x128xf32>
    %211 = arith.addf %207, %210 : vector<1x128xf32>
    %c37 = arith.constant 37 : index
    %212 = memref.load %arg1[%c37] : memref<50xf32, #tpu.memory_space<smem>>
    %213 = vector.broadcast %212 : f32 to vector<1x128xf32>
    %214 = arith.mulf %5, %213 : vector<1x128xf32>
    %215 = arith.addf %211, %214 : vector<1x128xf32>
    %c38 = arith.constant 38 : index
    %216 = memref.load %arg1[%c38] : memref<50xf32, #tpu.memory_space<smem>>
    %217 = vector.broadcast %216 : f32 to vector<1x128xf32>
    %218 = arith.mulf %7, %217 : vector<1x128xf32>
    %219 = arith.addf %215, %218 : vector<1x128xf32>
    %c39 = arith.constant 39 : index
    %220 = memref.load %arg1[%c39] : memref<50xf32, #tpu.memory_space<smem>>
    %221 = vector.broadcast %220 : f32 to vector<1x128xf32>
    %222 = arith.mulf %9, %221 : vector<1x128xf32>
    %223 = arith.addf %219, %222 : vector<1x128xf32>
    %c7_35 = arith.constant 7 : index
    %224 = memref.load %arg2[%c7_35] : memref<10xf32, #tpu.memory_space<smem>>
    %225 = vector.broadcast %224 : f32 to vector<1x128xf32>
    %226 = arith.addf %223, %225 : vector<1x128xf32>
    %cst_36 = arith.constant 0.000000e+00 : f32
    %227 = vector.broadcast %cst_36 : f32 to vector<1x128xf32>
    %228 = arith.maximumf %226, %227 : vector<1x128xf32>
    %c7_37 = arith.constant 7 : index
    %229 = memref.load %arg3[%c7_37] : memref<10xf32, #tpu.memory_space<smem>>
    %230 = vector.broadcast %229 : f32 to vector<1x128xf32>
    %231 = arith.mulf %228, %230 : vector<1x128xf32>
    %232 = arith.addf %204, %231 : vector<1x128xf32>
    %c40 = arith.constant 40 : index
    %233 = memref.load %arg1[%c40] : memref<50xf32, #tpu.memory_space<smem>>
    %234 = vector.broadcast %233 : f32 to vector<1x128xf32>
    %235 = arith.mulf %1, %234 : vector<1x128xf32>
    %c41 = arith.constant 41 : index
    %236 = memref.load %arg1[%c41] : memref<50xf32, #tpu.memory_space<smem>>
    %237 = vector.broadcast %236 : f32 to vector<1x128xf32>
    %238 = arith.mulf %3, %237 : vector<1x128xf32>
    %239 = arith.addf %235, %238 : vector<1x128xf32>
    %c42 = arith.constant 42 : index
    %240 = memref.load %arg1[%c42] : memref<50xf32, #tpu.memory_space<smem>>
    %241 = vector.broadcast %240 : f32 to vector<1x128xf32>
    %242 = arith.mulf %5, %241 : vector<1x128xf32>
    %243 = arith.addf %239, %242 : vector<1x128xf32>
    %c43 = arith.constant 43 : index
    %244 = memref.load %arg1[%c43] : memref<50xf32, #tpu.memory_space<smem>>
    %245 = vector.broadcast %244 : f32 to vector<1x128xf32>
    %246 = arith.mulf %7, %245 : vector<1x128xf32>
    %247 = arith.addf %243, %246 : vector<1x128xf32>
    %c44 = arith.constant 44 : index
    %248 = memref.load %arg1[%c44] : memref<50xf32, #tpu.memory_space<smem>>
    %249 = vector.broadcast %248 : f32 to vector<1x128xf32>
    %250 = arith.mulf %9, %249 : vector<1x128xf32>
    %251 = arith.addf %247, %250 : vector<1x128xf32>
    %c8_38 = arith.constant 8 : index
    %252 = memref.load %arg2[%c8_38] : memref<10xf32, #tpu.memory_space<smem>>
    %253 = vector.broadcast %252 : f32 to vector<1x128xf32>
    %254 = arith.addf %251, %253 : vector<1x128xf32>
    %cst_39 = arith.constant 0.000000e+00 : f32
    %255 = vector.broadcast %cst_39 : f32 to vector<1x128xf32>
    %256 = arith.maximumf %254, %255 : vector<1x128xf32>
    %c8_40 = arith.constant 8 : index
    %257 = memref.load %arg3[%c8_40] : memref<10xf32, #tpu.memory_space<smem>>
    %258 = vector.broadcast %257 : f32 to vector<1x128xf32>
    %259 = arith.mulf %256, %258 : vector<1x128xf32>
    %260 = arith.addf %232, %259 : vector<1x128xf32>
    %c45 = arith.constant 45 : index
    %261 = memref.load %arg1[%c45] : memref<50xf32, #tpu.memory_space<smem>>
    %262 = vector.broadcast %261 : f32 to vector<1x128xf32>
    %263 = arith.mulf %1, %262 : vector<1x128xf32>
    %c46 = arith.constant 46 : index
    %264 = memref.load %arg1[%c46] : memref<50xf32, #tpu.memory_space<smem>>
    %265 = vector.broadcast %264 : f32 to vector<1x128xf32>
    %266 = arith.mulf %3, %265 : vector<1x128xf32>
    %267 = arith.addf %263, %266 : vector<1x128xf32>
    %c47 = arith.constant 47 : index
    %268 = memref.load %arg1[%c47] : memref<50xf32, #tpu.memory_space<smem>>
    %269 = vector.broadcast %268 : f32 to vector<1x128xf32>
    %270 = arith.mulf %5, %269 : vector<1x128xf32>
    %271 = arith.addf %267, %270 : vector<1x128xf32>
    %c48 = arith.constant 48 : index
    %272 = memref.load %arg1[%c48] : memref<50xf32, #tpu.memory_space<smem>>
    %273 = vector.broadcast %272 : f32 to vector<1x128xf32>
    %274 = arith.mulf %7, %273 : vector<1x128xf32>
    %275 = arith.addf %271, %274 : vector<1x128xf32>
    %c49 = arith.constant 49 : index
    %276 = memref.load %arg1[%c49] : memref<50xf32, #tpu.memory_space<smem>>
    %277 = vector.broadcast %276 : f32 to vector<1x128xf32>
    %278 = arith.mulf %9, %277 : vector<1x128xf32>
    %279 = arith.addf %275, %278 : vector<1x128xf32>
    %c9_41 = arith.constant 9 : index
    %280 = memref.load %arg2[%c9_41] : memref<10xf32, #tpu.memory_space<smem>>
    %281 = vector.broadcast %280 : f32 to vector<1x128xf32>
    %282 = arith.addf %279, %281 : vector<1x128xf32>
    %cst_42 = arith.constant 0.000000e+00 : f32
    %283 = vector.broadcast %cst_42 : f32 to vector<1x128xf32>
    %284 = arith.maximumf %282, %283 : vector<1x128xf32>
    %c9_43 = arith.constant 9 : index
    %285 = memref.load %arg3[%c9_43] : memref<10xf32, #tpu.memory_space<smem>>
    %286 = vector.broadcast %285 : f32 to vector<1x128xf32>
    %287 = arith.mulf %284, %286 : vector<1x128xf32>
    %288 = arith.addf %260, %287 : vector<1x128xf32>
    %c0_44 = arith.constant 0 : index
    %289 = memref.load %arg4[%c0_44] : memref<1xf32, #tpu.memory_space<smem>>
    %290 = vector.broadcast %289 : f32 to vector<1x128xf32>
    %291 = arith.addf %288, %290 : vector<1x128xf32>
    %c0_45 = arith.constant 0 : index
    %c0_46 = arith.constant 0 : index
    %292 = vector.load %arg6[%c0_45, %c0_46] : memref<1x128xf32, #tpu.memory_space<vmem>>, vector<1x128xf32>
    tpu.vector_store %arg6[%c0_45, %c0_46], %291 {strides = array<i32>} : memref<1x128xf32, #tpu.memory_space<vmem>>, vector<1x128xf32>,
    return
  }
  func.func @transform_0(%arg0: i32) -> i32 {
    %c0_i32 = arith.constant 0 : i32
    %c0_i32_0 = arith.constant 0 : i32
    return %c0_i32 : i32
  }
  func.func @transform_1(%arg0: i32) -> i32 {
    %c0_i32 = arith.constant 0 : i32
    %c0_i32_0 = arith.constant 0 : i32
    return %c0_i32 : i32
  }
  func.func @transform_2(%arg0: i32) -> i32 {
    %c0_i32 = arith.constant 0 : i32
    %c0_i32_0 = arith.constant 0 : i32
    return %c0_i32 : i32
  }
  func.func @transform_3(%arg0: i32) -> i32 {
    %c0_i32 = arith.constant 0 : i32
    %c0_i32_0 = arith.constant 0 : i32
    return %c0_i32 : i32
  }
  func.func @transform_4(%arg0: i32) -> (i32, i32, i32) {
    %c0_i32 = arith.constant 0 : i32
    %c0_i32_0 = arith.constant 0 : i32
    %c0_i32_1 = arith.constant 0 : i32
    return %c0_i32, %arg0, %c0_i32_0 : i32, i32, i32
  }
  func.func @transform_5(%arg0: i32) -> (i32, i32) {
    %c0_i32 = arith.constant 0 : i32
    %c0_i32_0 = arith.constant 0 : i32
    return %arg0, %c0_i32 : i32, i32
  }
}

</mosaic_0001>

<llo_original>
// kernel: net_forward.1
$region0: #{net_forward.1}
  #allocation0 [shape = 'u32[]', space=smem, size = 0x4, offset = 0x4, fixed_abs, tag = 'smem constant byte address 0x4 - core index']
  #allocation1 [shape = 'u32[72,128]{1,0:T(1,128)}', space=vmem, size = 0x9000, scoped, tag = 'internal scratch']
  #allocation2 [shape = 'f32[1]{0:T(128)S(6)}', space=smem, size = 0x200, scoped, tag = 'scoped memory for net_forward.1']
  %s0 = inlined_call_operand.vmem [shape: f32[50], index: 0, kind: input, shape index: {}]
  %s1 = inlined_call_operand.vmem [shape: f32[10], index: 1, kind: input, shape index: {}]
  %s2 = inlined_call_operand.vmem [shape: f32[10], index: 2, kind: input, shape index: {}]
  %s3 = inlined_call_operand.<no memory space> [shape: f32[1], index: 3, kind: input, shape index: {}]
  %s4 = inlined_call_operand.vmem [shape: f32[5,1,128], index: 4, kind: input, shape index: {}]
  %s5 = inlined_call_operand.vmem [shape: f32[1,128], index: 5, kind: output, shape index: {}]
  %s6 = sld [smem:[#allocation0]]
  $region42: #{net_forward.1} parent=0
    _
  %s8 = ssub.s32 1, %s6
  %s9 = scalar_select 0, %s8, %s6
  %10 = sst [smem:[#allocation2]] %s3
  $region1: #{net_forward.1} parent=0
    #allocation3 [shape = 'u8[512]{0}', space=smem, size = 0x200, scoped, tag = 'input window, operand 0, single buffered']
    #allocation4 [shape = 's32[1]{0}', space=sflag, size = 0x4, scoped, tag = 'scoped memory for net_forward.1']
    #allocation5 [shape = 'u8[512]{0}', space=smem, size = 0x200, scoped, tag = 'input window, operand 1, single buffered']
    #allocation6 [shape = 's32[1]{0}', space=sflag, size = 0x4, scoped, tag = 'scoped memory for net_forward.1']
    #allocation7 [shape = 'u8[512]{0}', space=smem, size = 0x200, scoped, tag = 'input window, operand 2, single buffered']
    %11 = vsyncpa [#allocation4], 0
    %12 = vsyncpa [#allocation6], 0
    // Predicated region
    $region2: #{net_forward.1} parent=1 // pred_check
      _
    $region3: #{net_forward.1} parent=1 // pred_check_branch
      %14 = sbr.rel (0) target = $region5
    $region4: #{net_forward.1} parent=1 // pred_region
      %16 = vsyncadd [#allocation4], 0
      %s18 = sshll.u32 %s0, 4
      %s19 = int_to_ptr.vmem [resolvable:$true] %s18
      %21 = dma.vmem_to_smem %s19, 16, [#allocation3], [#allocation4]
    $region5: #{net_forward.1} parent=1 // pred_fallthru
      _
    // Predicated region
    $region6: #{net_forward.1} parent=1 // pred_check
      _
    $region7: #{net_forward.1} parent=1 // pred_check_branch
      %23 = sbr.rel (0) target = $region9
    $region8: #{net_forward.1} parent=1 // pred_region
      %25 = vsyncadd [#allocation6], 0
      %s27 = sshll.u32 %s1, 4
      %s28 = int_to_ptr.vmem [resolvable:$true] %s27
      %30 = dma.vmem_to_smem %s28, 16, [#allocation5], [#allocation6]
    $region9: #{net_forward.1} parent=1 // pred_fallthru
      _
    // Predicated region
    $region10: #{net_forward.1} parent=1 // pred_check
      _
    $region11: #{net_forward.1} parent=1 // pred_check_branch
      %32 = sbr.rel (0) target = $region13
    $region12: #{net_forward.1} parent=1 // pred_region
      %34 = vsyncadd [#allocation6], 0
      %s36 = sshll.u32 %s2, 4
      %s37 = int_to_ptr.vmem [resolvable:$true] %s36
      %39 = dma.vmem_to_smem %s37, 16, [#allocation7], [#allocation6]
    $region13: #{net_forward.1} parent=1 // pred_fallthru
      _
    // Predicated region
    $region14: #{net_forward.1} parent=1 // pred_check
      _
    $region15: #{net_forward.1} parent=1 // pred_check_branch
      %41 = sbr.rel (0) target = $region17
    $region16: #{net_forward.1} parent=1 // pred_region
      _
    $region17: #{net_forward.1} parent=1 // pred_fallthru
      _
    // Predicated region
    $region18: #{net_forward.1} parent=1 // pred_check
      _
    $region19: #{net_forward.1} parent=1 // pred_check_branch
      %43 = sbr.rel (0) target = $region21
    $region20: #{net_forward.1} parent=1 // pred_region
      _
    $region21: #{net_forward.1} parent=1 // pred_fallthru
      _
    // Predicated region
    $region22: #{net_forward.1} parent=1 // pred_check
      _
    $region23: #{net_forward.1} parent=1 // pred_check_branch
      %45 = sbr.rel (0) target = $region25
    $region24: #{net_forward.1} parent=1 // pred_region
      %47 = dma.done [#allocation4], 16
    $region25: #{net_forward.1} parent=1 // pred_fallthru
      _
    // Predicated region
    $region26: #{net_forward.1} parent=1 // pred_check
      _
    $region27: #{net_forward.1} parent=1 // pred_check_branch
      %49 = sbr.rel (0) target = $region29
    $region28: #{net_forward.1} parent=1 // pred_region
      %51 = dma.done [#allocation6], 16
    $region29: #{net_forward.1} parent=1 // pred_fallthru
      _
    // Predicated region
    $region30: #{net_forward.1} parent=1 // pred_check
      _
    $region31: #{net_forward.1} parent=1 // pred_check_branch
      %53 = sbr.rel (0) target = $region33
    $region32: #{net_forward.1} parent=1 // pred_region
      %55 = dma.done [#allocation6], 16
    $region33: #{net_forward.1} parent=1 // pred_fallthru
      _
    %56 = sfence
    %v57 = vld [vmem:[%s4] sm:$0x1]
    %s58 = scalar_lea.vmem %s4, 1
    %v59 = vld [vmem:[%s58] sm:$0x1]
    %s60 = scalar_lea.vmem %s4, 2
    %v61 = vld [vmem:[%s60] sm:$0x1]
    %s62 = scalar_lea.vmem %s4, 3
    %v63 = vld [vmem:[%s62] sm:$0x1]
    %s64 = scalar_lea.vmem %s4, 4
    %v65 = vld [vmem:[%s64] sm:$0x1]
    %s66 = sld [smem:[#allocation3]]
    %v67 = vstv %s66
    %v68 = vmul.f32 %v57, %v67
    %s69 = sld [smem:[#allocation3 + $0x1]]
    %v70 = vstv %s69
    %v71 = vmul.f32 %v59, %v70
    %v72 = vadd.f32 %v68, %v71
    %s73 = sld [smem:[#allocation3 + $0x2]]
    %v74 = vstv %s73
    %v75 = vmul.f32 %v61, %v74
    %v76 = vadd.f32 %v72, %v75
    %s77 = sld [smem:[#allocation3 + $0x3]]
    %v78 = vstv %s77
    %v79 = vmul.f32 %v63, %v78
    %v80 = vadd.f32 %v76, %v79
    %s81 = sld [smem:[#allocation3 + $0x4]]
    %v82 = vstv %s81
    %v83 = vmul.f32 %v65, %v82
    %v84 = vadd.f32 %v80, %v83
    %s85 = sld [smem:[#allocation5]]
    %v86 = vstv %s85
    %v87 = vadd.f32 %v84, %v86
    %v88 = vmax.f32 %v87, 0.0
    %s89 = sld [smem:[#allocation7]]
    %v90 = vstv %s89
    %v91 = vmul.f32 %v88, %v90
    %s92 = sld [smem:[#allocation3 + $0x5]]
    %v93 = vstv %s92
    %v94 = vmul.f32 %v57, %v93
    %s95 = sld [smem:[#allocation3 + $0x6]]
    %v96 = vstv %s95
    %v97 = vmul.f32 %v59, %v96
    %v98 = vadd.f32 %v94, %v97
    %s99 = sld [smem:[#allocation3 + $0x7]]
    %v100 = vstv %s99
    %v101 = vmul.f32 %v61, %v100
    %v102 = vadd.f32 %v98, %v101
    %s103 = sld [smem:[#allocation3 + $0x8]]
    %v104 = vstv %s103
    %v105 = vmul.f32 %v63, %v104
    %v106 = vadd.f32 %v102, %v105
    %s107 = sld [smem:[#allocation3 + $0x9]]
    %v108 = vstv %s107
    %v109 = vmul.f32 %v65, %v108
    %v110 = vadd.f32 %v106, %v109
    %s111 = sld [smem:[#allocation5 + $0x1]]
    %v112 = vstv %s111
    %v113 = vadd.f32 %v110, %v112
    %v114 = vmax.f32 %v113, 0.0
    %s115 = sld [smem:[#allocation7 + $0x1]]
    %v116 = vstv %s115
    %v117 = vmul.f32 %v114, %v116
    %v118 = vadd.f32 %v91, %v117
    %s119 = sld [smem:[#allocation3 + $0xa]]
    %v120 = vstv %s119
    %v121 = vmul.f32 %v57, %v120
    %s122 = sld [smem:[#allocation3 + $0xb]]
    %v123 = vstv %s122
    %v124 = vmul.f32 %v59, %v123
    %v125 = vadd.f32 %v121, %v124
    %s126 = sld [smem:[#allocation3 + $0xc]]
    %v127 = vstv %s126
    %v128 = vmul.f32 %v61, %v127
    %v129 = vadd.f32 %v125, %v128
    %s130 = sld [smem:[#allocation3 + $0xd]]
    %v131 = vstv %s130
    %v132 = vmul.f32 %v63, %v131
    %v133 = vadd.f32 %v129, %v132
    %s134 = sld [smem:[#allocation3 + $0xe]]
    %v135 = vstv %s134
    %v136 = vmul.f32 %v65, %v135
    %v137 = vadd.f32 %v133, %v136
    %s138 = sld [smem:[#allocation5 + $0x2]]
    %v139 = vstv %s138
    %v140 = vadd.f32 %v137, %v139
    %v141 = vmax.f32 %v140, 0.0
    %s142 = sld [smem:[#allocation7 + $0x2]]
    %v143 = vstv %s142
    %v144 = vmul.f32 %v141, %v143
    %v145 = vadd.f32 %v118, %v144
    %s146 = sld [smem:[#allocation3 + $0xf]]
    %v147 = vstv %s146
    %v148 = vmul.f32 %v57, %v147
    %s149 = sld [smem:[#allocation3 + $0x10]]
    %v150 = vstv %s149
    %v151 = vmul.f32 %v59, %v150
    %v152 = vadd.f32 %v148, %v151
    %s153 = sld [smem:[#allocation3 + $0x11]]
    %v154 = vstv %s153
    %v155 = vmul.f32 %v61, %v154
    %v156 = vadd.f32 %v152, %v155
    %s157 = sld [smem:[#allocation3 + $0x12]]
    %v158 = vstv %s157
    %v159 = vmul.f32 %v63, %v158
    %v160 = vadd.f32 %v156, %v159
    %s161 = sld [smem:[#allocation3 + $0x13]]
    %v162 = vstv %s161
    %v163 = vmul.f32 %v65, %v162
    %v164 = vadd.f32 %v160, %v163
    %s165 = sld [smem:[#allocation5 + $0x3]]
    %v166 = vstv %s165
    %v167 = vadd.f32 %v164, %v166
    %v168 = vmax.f32 %v167, 0.0
    %s169 = sld [smem:[#allocation7 + $0x3]]
    %v170 = vstv %s169
    %v171 = vmul.f32 %v168, %v170
    %v172 = vadd.f32 %v145, %v171
    %s173 = sld [smem:[#allocation3 + $0x14]]
    %v174 = vstv %s173
    %v175 = vmul.f32 %v57, %v174
    %s176 = sld [smem:[#allocation3 + $0x15]]
    %v177 = vstv %s176
    %v178 = vmul.f32 %v59, %v177
    %v179 = vadd.f32 %v175, %v178
    %s180 = sld [smem:[#allocation3 + $0x16]]
    %v181 = vstv %s180
    %v182 = vmul.f32 %v61, %v181
    %v183 = vadd.f32 %v179, %v182
    %s184 = sld [smem:[#allocation3 + $0x17]]
    %v185 = vstv %s184
    %v186 = vmul.f32 %v63, %v185
    %v187 = vadd.f32 %v183, %v186
    %s188 = sld [smem:[#allocation3 + $0x18]]
    %v189 = vstv %s188
    %v190 = vmul.f32 %v65, %v189
    %v191 = vadd.f32 %v187, %v190
    %s192 = sld [smem:[#allocation5 + $0x4]]
    %v193 = vstv %s192
    %v194 = vadd.f32 %v191, %v193
    %v195 = vmax.f32 %v194, 0.0
    %s196 = sld [smem:[#allocation7 + $0x4]]
    %v197 = vstv %s196
    %v198 = vmul.f32 %v195, %v197
    %v199 = vadd.f32 %v172, %v198
    %s200 = sld [smem:[#allocation3 + $0x19]]
    %v201 = vstv %s200
    %v202 = vmul.f32 %v57, %v201
    %s203 = sld [smem:[#allocation3 + $0x1a]]
    %v204 = vstv %s203
    %v205 = vmul.f32 %v59, %v204
    %v206 = vadd.f32 %v202, %v205
    %s207 = sld [smem:[#allocation3 + $0x1b]]
    %v208 = vstv %s207
    %v209 = vmul.f32 %v61, %v208
    %v210 = vadd.f32 %v206, %v209
    %s211 = sld [smem:[#allocation3 + $0x1c]]
    %v212 = vstv %s211
    %v213 = vmul.f32 %v63, %v212
    %v214 = vadd.f32 %v210, %v213
    %s215 = sld [smem:[#allocation3 + $0x1d]]
    %v216 = vstv %s215
    %v217 = vmul.f32 %v65, %v216
    %v218 = vadd.f32 %v214, %v217
    %s219 = sld [smem:[#allocation5 + $0x5]]
    %v220 = vstv %s219
    %v221 = vadd.f32 %v218, %v220
    %v222 = vmax.f32 %v221, 0.0
    %s223 = sld [smem:[#allocation7 + $0x5]]
    %v224 = vstv %s223
    %v225 = vmul.f32 %v222, %v224
    %v226 = vadd.f32 %v199, %v225
    %s227 = sld [smem:[#allocation3 + $0x1e]]
    %v228 = vstv %s227
    %v229 = vmul.f32 %v57, %v228
    %s230 = sld [smem:[#allocation3 + $0x1f]]
    %v231 = vstv %s230
    %v232 = vmul.f32 %v59, %v231
    %v233 = vadd.f32 %v229, %v232
    %s234 = sld [smem:[#allocation3 + $0x20]]
    %v235 = vstv %s234
    %v236 = vmul.f32 %v61, %v235
    %v237 = vadd.f32 %v233, %v236
    %s238 = sld [smem:[#allocation3 + $0x21]]
    %v239 = vstv %s238
    %v240 = vmul.f32 %v63, %v239
    %v241 = vadd.f32 %v237, %v240
    %s242 = sld [smem:[#allocation3 + $0x22]]
    %v243 = vstv %s242
    %v244 = vmul.f32 %v65, %v243
    %v245 = vadd.f32 %v241, %v244
    %s246 = sld [smem:[#allocation5 + $0x6]]
    %v247 = vstv %s246
    %v248 = vadd.f32 %v245, %v247
    %v249 = vmax.f32 %v248, 0.0
    %s250 = sld [smem:[#allocation7 + $0x6]]
    %v251 = vstv %s250
    %v252 = vmul.f32 %v249, %v251
    %v253 = vadd.f32 %v226, %v252
    %s254 = sld [smem:[#allocation3 + $0x23]]
    %v255 = vstv %s254
    %v256 = vmul.f32 %v57, %v255
    %s257 = sld [smem:[#allocation3 + $0x24]]
    %v258 = vstv %s257
    %v259 = vmul.f32 %v59, %v258
    %v260 = vadd.f32 %v256, %v259
    %s261 = sld [smem:[#allocation3 + $0x25]]
    %v262 = vstv %s261
    %v263 = vmul.f32 %v61, %v262
    %v264 = vadd.f32 %v260, %v263
    %s265 = sld [smem:[#allocation3 + $0x26]]
    %v266 = vstv %s265
    %v267 = vmul.f32 %v63, %v266
    %v268 = vadd.f32 %v264, %v267
    %s269 = sld [smem:[#allocation3 + $0x27]]
    %v270 = vstv %s269
    %v271 = vmul.f32 %v65, %v270
    %v272 = vadd.f32 %v268, %v271
    %s273 = sld [smem:[#allocation5 + $0x7]]
    %v274 = vstv %s273
    %v275 = vadd.f32 %v272, %v274
    %v276 = vmax.f32 %v275, 0.0
    %s277 = sld [smem:[#allocation7 + $0x7]]
    %v278 = vstv %s277
    %v279 = vmul.f32 %v276, %v278
    %v280 = vadd.f32 %v253, %v279
    %s281 = sld [smem:[#allocation3 + $0x28]]
    %v282 = vstv %s281
    %v283 = vmul.f32 %v57, %v282
    %s284 = sld [smem:[#allocation3 + $0x29]]
    %v285 = vstv %s284
    %v286 = vmul.f32 %v59, %v285
    %v287 = vadd.f32 %v283, %v286
    %s288 = sld [smem:[#allocation3 + $0x2a]]
    %v289 = vstv %s288
    %v290 = vmul.f32 %v61, %v289
    %v291 = vadd.f32 %v287, %v290
    %s292 = sld [smem:[#allocation3 + $0x2b]]
    %v293 = vstv %s292
    %v294 = vmul.f32 %v63, %v293
    %v295 = vadd.f32 %v291, %v294
    %s296 = sld [smem:[#allocation3 + $0x2c]]
    %v297 = vstv %s296
    %v298 = vmul.f32 %v65, %v297
    %v299 = vadd.f32 %v295, %v298
    %s300 = sld [smem:[#allocation5 + $0x8]]
    %v301 = vstv %s300
    %v302 = vadd.f32 %v299, %v301
    %v303 = vmax.f32 %v302, 0.0
    %s304 = sld [smem:[#allocation7 + $0x8]]
    %v305 = vstv %s304
    %v306 = vmul.f32 %v303, %v305
    %v307 = vadd.f32 %v280, %v306
    %s308 = sld [smem:[#allocation3 + $0x2d]]
    %v309 = vstv %s308
    %v310 = vmul.f32 %v57, %v309
    %s311 = sld [smem:[#allocation3 + $0x2e]]
    %v312 = vstv %s311
    %v313 = vmul.f32 %v59, %v312
    %v314 = vadd.f32 %v310, %v313
    %s315 = sld [smem:[#allocation3 + $0x2f]]
    %v316 = vstv %s315
    %v317 = vmul.f32 %v61, %v316
    %v318 = vadd.f32 %v314, %v317
    %s319 = sld [smem:[#allocation3 + $0x30]]
    %v320 = vstv %s319
    %v321 = vmul.f32 %v63, %v320
    %v322 = vadd.f32 %v318, %v321
    %s323 = sld [smem:[#allocation3 + $0x31]]
    %v324 = vstv %s323
    %v325 = vmul.f32 %v65, %v324
    %v326 = vadd.f32 %v322, %v325
    %s327 = sld [smem:[#allocation5 + $0x9]]
    %v328 = vstv %s327
    %v329 = vadd.f32 %v326, %v328
    %v330 = vmax.f32 %v329, 0.0
    %s331 = sld [smem:[#allocation7 + $0x9]]
    %v332 = vstv %s331
    %v333 = vmul.f32 %v330, %v332
    %v334 = vadd.f32 %v307, %v333
    %s335 = sld [smem:[#allocation2]]
    %v336 = vstv %s335
    %v337 = vadd.f32 %v334, %v336
    %338 = vst [vmem:[%s5] sm:$0x1] %v337
    // Predicated region
    $region34: #{net_forward.1} parent=1 // pred_check
      _
    $region35: #{net_forward.1} parent=1 // pred_check_branch
      %340 = sbr.rel (0) target = $region37
    $region36: #{net_forward.1} parent=1 // pred_region
      _
    $region37: #{net_forward.1} parent=1 // pred_fallthru
      _
    // Predicated region
    $region38: #{net_forward.1} parent=1 // pred_check
      _
    $region39: #{net_forward.1} parent=1 // pred_check_branch
      %342 = sbr.rel (0) target = $region41
    $region40: #{net_forward.1} parent=1 // pred_region
      _
    $region41: #{net_forward.1} parent=1 // pred_fallthru
      _
    %343 = vsyncpa [#allocation4], 1
    %344 = vsyncpa [#allocation6], 1

</llo_original>
